<compile_context>
chip_gen: v5e
topology: v5e:2x2
jax: 0.10.0
libtpu: 0.0.40
codegen_flags: <defaults>
</compile_context>

<pallas_src>
import jax
import jax.numpy as jnp
from jax.experimental import pallas as pl
from jax.experimental.pallas import tpu as pltpu

HIDDEN = 64
HEAD_PAD = 128          # lane-dense padded width of the 1-wide value head


def _round_up(x, m):
    return (x + m - 1) // m * m


def value_mlp_kernel(x_ref, w1_ref, b1_ref, w2_ref, b2_ref, w3_ref, b3_ref,
                     out_ref):
    # bf16 operands on the MXU, f32 accumulation; bias + tanh in f32.
    x = x_ref[...].astype(jnp.bfloat16)                          # (TB, D_in)
    h1 = jnp.tanh(
        jnp.dot(x, w1_ref[...], preferred_element_type=jnp.float32)
        + b1_ref[...])                                           # (TB, 64) f32
    h2 = jnp.tanh(
        jnp.dot(h1.astype(jnp.bfloat16), w2_ref[...],
                preferred_element_type=jnp.float32)
        + b2_ref[...])                                           # (TB, 64) f32
    v = (jnp.dot(h2.astype(jnp.bfloat16), w3_ref[...],
                 preferred_element_type=jnp.float32)
         + b3_ref[...])                                          # (TB, 128) f32
    out_ref[...] = v.astype(out_ref.dtype)                       # lane-dense


def value_forward(x, params, *, tile_b=512):
    """x: (B, num_inputs) float32. Returns (B, 1) float32 state values."""
    w1, b1, w2, b2, w3, b3 = params
    B, d_in = x.shape

    # Pad the head to 128 output lanes (zeros) -> lane-dense matmul + store.
    w3p = jnp.zeros((HIDDEN, HEAD_PAD), jnp.float32).at[:, :1].set(w3)
    b3p = jnp.zeros((1, HEAD_PAD), jnp.float32).at[:, :1].set(b3)

    # bf16 weights for the MXU (f32 accumulation inside the kernel).
    w1b = w1.astype(jnp.bfloat16)
    w2b = w2.astype(jnp.bfloat16)
    w3b = w3p.astype(jnp.bfloat16)

    # Batch tiling: TILE_B rows per grid step, batch padded to a multiple.
    tb = min(tile_b, _round_up(B, 8))          # multiple of 8 (sublane align)
    b_pad = _round_up(B, tb)
    if b_pad != B:
        x = jnp.pad(x, ((0, b_pad - B), (0, 0)))
    num_tiles = b_pad // tb

    flops = 2 * b_pad * (d_in * HIDDEN + HIDDEN * HIDDEN + HIDDEN * HEAD_PAD)
    bytes_accessed = (b_pad * d_in * 4                                   # x
                      + (d_in * HIDDEN + HIDDEN * HIDDEN
                         + HIDDEN * HEAD_PAD) * 2                        # bf16 W
                      + 2 * HIDDEN * 4 + HEAD_PAD * 4                    # biases
                      + b_pad * HEAD_PAD * 4)                            # out

    out_wide = pl.pallas_call(
        value_mlp_kernel,
        out_shape=jax.ShapeDtypeStruct((b_pad, HEAD_PAD), jnp.float32),
        grid_spec=pl.GridSpec(
            grid=(num_tiles,),
            in_specs=[
                pl.BlockSpec((tb, d_in), lambda i: (i, 0)),          # x tile
                pl.BlockSpec((d_in, HIDDEN), lambda i: (0, 0)),      # w1 (resident)
                pl.BlockSpec((1, HIDDEN), lambda i: (0, 0)),         # b1
                pl.BlockSpec((HIDDEN, HIDDEN), lambda i: (0, 0)),    # w2
                pl.BlockSpec((1, HIDDEN), lambda i: (0, 0)),         # b2
                pl.BlockSpec((HIDDEN, HEAD_PAD), lambda i: (0, 0)),  # w3 (padded)
                pl.BlockSpec((1, HEAD_PAD), lambda i: (0, 0)),       # b3 (padded)
            ],
            out_specs=pl.BlockSpec((tb, HEAD_PAD), lambda i: (i, 0)),
        ),
        compiler_params=pltpu.CompilerParams(
            dimension_semantics=("parallel",)),
        cost_estimate=pl.CostEstimate(
            flops=flops,
            transcendentals=2 * HIDDEN * b_pad,
            bytes_accessed=bytes_accessed),
    )(x, w1b, b1, w2b, b2, w3b, b3p)

    return out_wide[:B, :1]


def init_value_params(key, num_inputs):
    """Init mirroring nn.Linear defaults (U[-1/sqrt(fan_in), +1/sqrt(fan_in)])
    plus the module's value_head scaling (weight*0.1, bias*0)."""
    k1, k2, k3, k4, k5, k6 = jax.random.split(key, 6)

    def linear_init(kw, kb, fan_in, fan_out):
        bound = 1.0 / jnp.sqrt(fan_in)
        # stored as (in, out) for the kernel's x @ W convention
        w = jax.random.uniform(kw, (fan_in, fan_out), jnp.float32,
                               minval=-bound, maxval=bound)
        b = jax.random.uniform(kb, (1, fan_out), jnp.float32,
                               minval=-bound, maxval=bound)
        return w, b

    w1, b1 = linear_init(k1, k2, num_inputs, HIDDEN)
    w2, b2 = linear_init(k3, k4, HIDDEN, HIDDEN)
    w3, b3 = linear_init(k5, k6, HIDDEN, 1)
    w3 = w3 * 0.1          # value_head.weight.data.mul_(0.1)
    b3 = b3 * 0.0          # value_head.bias.data.mul_(0.0)
    return (w1, b1, w2, b2, w3, b3)


def _reference(x, params):
    w1, b1, w2, b2, w3, b3 = params
    h = jnp.tanh(x @ w1 + b1)
    h = jnp.tanh(h @ w2 + b2)
    return h @ w3 + b3


if __name__ == "__main__":
    key = jax.random.PRNGKey(0)
    kx, kx2, kp = jax.random.split(key, 3)

    num_inputs = 32
    params = init_value_params(kp, num_inputs)

    # Case 1: small batch, single tile.
    batch = 8
    x = jax.random.normal(kx, (batch, num_inputs), dtype=jnp.float32)
    out = jax.block_until_ready(value_forward(x, params))
    ref = _reference(x, params)
    assert out.shape == (batch, 1)
    # bf16 MXU operands (f32 accumulate) -> compare against f32 ref loosely.
    assert jnp.allclose(out, ref, atol=2e-2, rtol=2e-2)

    # Case 2: batch not a multiple of the tile -> exercises padding + grid>1.
    batch2 = 20
    x2 = jax.random.normal(kx2, (batch2, num_inputs), dtype=jnp.float32)
    out2 = jax.block_until_ready(value_forward(x2, params, tile_b=8))
    ref2 = _reference(x2, params)
    assert out2.shape == (batch2, 1)
    assert jnp.allclose(out2, ref2, atol=2e-2, rtol=2e-2)

    print("KERNEL_OK")
</pallas_src>

<mosaic_0001>
module attributes {stable_mosaic.version = 11 : i64} {
  func.func @value_mlp_kernel(%arg0: i32, %arg1: memref<8x32xf32, #tpu.memory_space<vmem>>, %arg2: memref<32x64xbf16, #tpu.memory_space<vmem>>, %arg3: memref<1x64xf32, #tpu.memory_space<vmem>>, %arg4: memref<64x64xbf16, #tpu.memory_space<vmem>>, %arg5: memref<1x64xf32, #tpu.memory_space<vmem>>, %arg6: memref<64x128xbf16, #tpu.memory_space<vmem>>, %arg7: memref<1x128xf32, #tpu.memory_space<vmem>>, %arg8: memref<8x128xf32, #tpu.memory_space<vmem>>) attributes {dimension_semantics = [#tpu.dimension_semantics<parallel>], iteration_bounds = array<i64: 1>, scalar_prefetch = 0 : i64, scratch_operands = 0 : i64, tpu.core_type = #tpu.core_type<tc>, window_params = [{transform_indices = @transform_0, window_bounds = array<i64: 8, 32>}, {pipeline_mode = #tpu.pipeline_mode<synchronous>, transform_indices = @transform_1, window_bounds = array<i64: 32, 64>}, {pipeline_mode = #tpu.pipeline_mode<synchronous>, transform_indices = @transform_2, window_bounds = array<i64: 1, 64>}, {pipeline_mode = #tpu.pipeline_mode<synchronous>, transform_indices = @transform_3, window_bounds = array<i64: 64, 64>}, {pipeline_mode = #tpu.pipeline_mode<synchronous>, transform_indices = @transform_4, window_bounds = array<i64: 1, 64>}, {pipeline_mode = #tpu.pipeline_mode<synchronous>, transform_indices = @transform_5, window_bounds = array<i64: 64, 128>}, {pipeline_mode = #tpu.pipeline_mode<synchronous>, transform_indices = @transform_6, window_bounds = array<i64: 1, 128>}, {transform_indices = @transform_7, window_bounds = array<i64: 8, 128>}]} {
    %c0 = arith.constant 0 : index
    %c0_0 = arith.constant 0 : index
    %0 = vector.load %arg1[%c0, %c0_0] : memref<8x32xf32, #tpu.memory_space<vmem>>, vector<8x32xf32>
    %1 = arith.truncf %0 : vector<8x32xf32> to vector<8x32xbf16>
    %c0_1 = arith.constant 0 : index
    %c0_2 = arith.constant 0 : index
    %2 = vector.load %arg2[%c0_1, %c0_2] : memref<32x64xbf16, #tpu.memory_space<vmem>>, vector<32x64xbf16>
    %cst = arith.constant dense<0.000000e+00> : vector<8x64xf32>
    %3 = tpu.matmul %1, %2, %cst {dimension_numbers = #tpu.dot_dimension_numbers<[1], [0], [0], [1], [0, 0, 1, 1], [], []>} : vector<8x32xbf16>, vector<32x64xbf16>, vector<8x64xf32> -> vector<8x64xf32>
    %c0_3 = arith.constant 0 : index
    %c0_4 = arith.constant 0 : index
    %4 = vector.load %arg3[%c0_3, %c0_4] : memref<1x64xf32, #tpu.memory_space<vmem>>, vector<1x64xf32>
    %5 = vector.broadcast %4 : vector<1x64xf32> to vector<8x64xf32>
    %6 = arith.addf %3, %5 : vector<8x64xf32>
    %7 = math.tanh %6 : vector<8x64xf32>
    %8 = arith.truncf %7 : vector<8x64xf32> to vector<8x64xbf16>
    %c0_5 = arith.constant 0 : index
    %c0_6 = arith.constant 0 : index
    %9 = vector.load %arg4[%c0_5, %c0_6] : memref<64x64xbf16, #tpu.memory_space<vmem>>, vector<64x64xbf16>
    %cst_7 = arith.constant dense<0.000000e+00> : vector<8x64xf32>
    %10 = tpu.matmul %8, %9, %cst_7 {dimension_numbers = #tpu.dot_dimension_numbers<[1], [0], [0], [1], [0, 0, 1, 1], [], []>} : vector<8x64xbf16>, vector<64x64xbf16>, vector<8x64xf32> -> vector<8x64xf32>
    %c0_8 = arith.constant 0 : index
    %c0_9 = arith.constant 0 : index
    %11 = vector.load %arg5[%c0_8, %c0_9] : memref<1x64xf32, #tpu.memory_space<vmem>>, vector<1x64xf32>
    %12 = vector.broadcast %11 : vector<1x64xf32> to vector<8x64xf32>
    %13 = arith.addf %10, %12 : vector<8x64xf32>
    %14 = math.tanh %13 : vector<8x64xf32>
    %15 = arith.truncf %14 : vector<8x64xf32> to vector<8x64xbf16>
    %c0_10 = arith.constant 0 : index
    %c0_11 = arith.constant 0 : index
    %16 = vector.load %arg6[%c0_10, %c0_11] : memref<64x128xbf16, #tpu.memory_space<vmem>>, vector<64x128xbf16>
    %cst_12 = arith.constant dense<0.000000e+00> : vector<8x128xf32>
    %17 = tpu.matmul %15, %16, %cst_12 {dimension_numbers = #tpu.dot_dimension_numbers<[1], [0], [0], [1], [0, 0, 1, 1], [], []>} : vector<8x64xbf16>, vector<64x128xbf16>, vector<8x128xf32> -> vector<8x128xf32>
    %c0_13 = arith.constant 0 : index
    %c0_14 = arith.constant 0 : index
    %18 = vector.load %arg7[%c0_13, %c0_14] : memref<1x128xf32, #tpu.memory_space<vmem>>, vector<1x128xf32>
    %19 = vector.broadcast %18 : vector<1x128xf32> to vector<8x128xf32>
    %20 = arith.addf %17, %19 : vector<8x128xf32>
    %c0_15 = arith.constant 0 : index
    %c0_16 = arith.constant 0 : index
    %21 = vector.load %arg8[%c0_15, %c0_16] : memref<8x128xf32, #tpu.memory_space<vmem>>, vector<8x128xf32>
    tpu.vector_store %arg8[%c0_15, %c0_16], %20 {strides = array<i32>} : memref<8x128xf32, #tpu.memory_space<vmem>>, vector<8x128xf32>,
    return
  }
  func.func @transform_0(%arg0: i32) -> (i32, i32) {
    %c0_i32 = arith.constant 0 : i32
    %c0_i32_0 = arith.constant 0 : i32
    return %arg0, %c0_i32 : i32, i32
  }
  func.func @transform_1(%arg0: i32) -> (i32, i32) {
    %c0_i32 = arith.constant 0 : i32
    %c0_i32_0 = arith.constant 0 : i32
    %c0_i32_1 = arith.constant 0 : i32
    return %c0_i32, %c0_i32_0 : i32, i32
  }
  func.func @transform_2(%arg0: i32) -> (i32, i32) {
    %c0_i32 = arith.constant 0 : i32
    %c0_i32_0 = arith.constant 0 : i32
    %c0_i32_1 = arith.constant 0 : i32
    return %c0_i32, %c0_i32_0 : i32, i32
  }
  func.func @transform_3(%arg0: i32) -> (i32, i32) {
    %c0_i32 = arith.constant 0 : i32
    %c0_i32_0 = arith.constant 0 : i32
    %c0_i32_1 = arith.constant 0 : i32
    return %c0_i32, %c0_i32_0 : i32, i32
  }
  func.func @transform_4(%arg0: i32) -> (i32, i32) {
    %c0_i32 = arith.constant 0 : i32
    %c0_i32_0 = arith.constant 0 : i32
    %c0_i32_1 = arith.constant 0 : i32
    return %c0_i32, %c0_i32_0 : i32, i32
  }
  func.func @transform_5(%arg0: i32) -> (i32, i32) {
    %c0_i32 = arith.constant 0 : i32
    %c0_i32_0 = arith.constant 0 : i32
    %c0_i32_1 = arith.constant 0 : i32
    return %c0_i32, %c0_i32_0 : i32, i32
  }
  func.func @transform_6(%arg0: i32) -> (i32, i32) {
    %c0_i32 = arith.constant 0 : i32
    %c0_i32_0 = arith.constant 0 : i32
    %c0_i32_1 = arith.constant 0 : i32
    return %c0_i32, %c0_i32_0 : i32, i32
  }
  func.func @transform_7(%arg0: i32) -> (i32, i32) {
    %c0_i32 = arith.constant 0 : i32
    %c0_i32_0 = arith.constant 0 : i32
    return %arg0, %c0_i32 : i32, i32
  }
}

</mosaic_0001>

<llo_original>
// kernel: tpu_custom_call.1
$region0: #{tpu_custom_call.1}
  #allocation0 [shape = 'u32[]', space=smem, size = 0x4, offset = 0x4, fixed_abs, tag = 'smem constant byte address 0x4 - core index']
  #allocation1 [shape = 'u32[72,128]{1,0:T(1,128)}', space=vmem, size = 0x9000, scoped, tag = 'internal scratch']
  %s0 = inlined_call_operand.hbm [shape: f32[8,32], index: 0, kind: input, shape index: {}]
  %s1 = inlined_call_operand.hbm [shape: bf16[32,64], index: 1, kind: input, shape index: {}]
  %s2 = inlined_call_operand.vmem [shape: f32[1,64], index: 2, kind: input, shape index: {}]
  %s3 = inlined_call_operand.hbm [shape: bf16[64,64], index: 3, kind: input, shape index: {}]
  %s4 = inlined_call_operand.vmem [shape: f32[1,64], index: 4, kind: input, shape index: {}]
  %s5 = inlined_call_operand.hbm [shape: bf16[64,128], index: 5, kind: input, shape index: {}]
  %s6 = inlined_call_operand.vmem [shape: f32[1,128], index: 6, kind: input, shape index: {}]
  %s7 = inlined_call_operand.hbm [shape: f32[8,128], index: 7, kind: output, shape index: {}]
  %s8 = sld [smem:[#allocation0]]
  $region54: #{tpu_custom_call.1} parent=0
    _
  %s10 = ssub.s32 1, %s8
  %s11 = scalar_select 0, %s10, %s8
  $region1: #{tpu_custom_call.1} parent=0
    #allocation2 [shape = 'u8[4096]{0}', space=vmem, size = 0x1000, scoped, tag = 'input window, operand 0, single buffered']
    #allocation3 [shape = 's32[1]{0}', space=sflag, size = 0x4, scoped, tag = 'scoped memory for tpu_custom_call.1']
    #allocation4 [shape = 's32[1]{0}', space=sflag, size = 0x4, scoped, tag = 'scoped memory for tpu_custom_call.1']
    #allocation5 [shape = 'u8[8192]{0}', space=vmem, size = 0x2000, scoped, tag = 'input window, operand 1, single buffered']
    #allocation6 [shape = 's32[1]{0}', space=sflag, size = 0x4, scoped, tag = 'scoped memory for tpu_custom_call.1']
    #allocation7 [shape = 'u8[16384]{0}', space=vmem, size = 0x4000, scoped, tag = 'input window, operand 3, single buffered']
    #allocation8 [shape = 'u8[16384]{0}', space=vmem, size = 0x4000, scoped, tag = 'input window, operand 5, single buffered']
    #allocation9 [shape = 's32[1]{0}', space=sflag, size = 0x4, scoped, tag = 'scoped memory for tpu_custom_call.1']
    #allocation10 [shape = 'u8[4096]{0}', space=vmem, size = 0x1000, scoped, tag = 'output window, operand 0, single buffered']
    %12 = vsyncpa [#allocation3], 0
    %13 = vsyncpa [#allocation6], 0
    %14 = vsyncpa [#allocation9], 0
    %15 = vsyncpa [#allocation4], 0
    // Predicated region
    $region2: #{tpu_custom_call.1} parent=1 // pred_check
      _
    $region3: #{tpu_custom_call.1} parent=1 // pred_check_branch
      %17 = sbr.rel (0) target = $region5
    $region4: #{tpu_custom_call.1} parent=1 // pred_region
      %19 = vsyncadd [#allocation3], 0
      %s21 = sshll.u32 %s0, 4
      %s22 = int_to_ptr.hbm [resolvable:$true] %s21
      %s23 = sshll.u32 [#allocation2], 4
      %s24 = int_to_ptr.vmem [resolvable:$true] %s23
      %26 = dma.hbm_to_vmem [thread:$0]  %s22, 128, %s24, [#allocation3]
    $region5: #{tpu_custom_call.1} parent=1 // pred_fallthru
      _
    // Predicated region
    $region6: #{tpu_custom_call.1} parent=1 // pred_check
      _
    $region7: #{tpu_custom_call.1} parent=1 // pred_check_branch
      %28 = sbr.rel (0) target = $region9
    $region8: #{tpu_custom_call.1} parent=1 // pred_region
      %30 = vsyncadd [#allocation6], 0
      %s31 = sshll.u32 %s1, 4
      %s32 = int_to_ptr.hbm [resolvable:$true] %s31
      %s33 = sshll.u32 [#allocation5], 4
      %s34 = int_to_ptr.vmem [resolvable:$true] %s33
      %39 = dma.hbm_to_vmem [thread:$0]  %s32, 256, %s34, [#allocation6], 64, 64, 4
    $region9: #{tpu_custom_call.1} parent=1 // pred_fallthru
      _
    // Predicated region
    $region10: #{tpu_custom_call.1} parent=1 // pred_check
      _
    $region11: #{tpu_custom_call.1} parent=1 // pred_check_branch
      %41 = sbr.rel (0) target = $region13
    $region12: #{tpu_custom_call.1} parent=1 // pred_region
      _
    $region13: #{tpu_custom_call.1} parent=1 // pred_fallthru
      _
    // Predicated region
    $region14: #{tpu_custom_call.1} parent=1 // pred_check
      _
    $region15: #{tpu_custom_call.1} parent=1 // pred_check_branch
      %43 = sbr.rel (0) target = $region17
    $region16: #{tpu_custom_call.1} parent=1 // pred_region
      %45 = vsyncadd [#allocation6], 0
      %s46 = sshll.u32 %s3, 4
      %s47 = int_to_ptr.hbm [resolvable:$true] %s46
      %s48 = sshll.u32 [#allocation7], 4
      %s49 = int_to_ptr.vmem [resolvable:$true] %s48
      %54 = dma.hbm_to_vmem [thread:$0]  %s47, 512, %s49, [#allocation6], 64, 64, 4
    $region17: #{tpu_custom_call.1} parent=1 // pred_fallthru
      _
    // Predicated region
    $region18: #{tpu_custom_call.1} parent=1 // pred_check
      _
    $region19: #{tpu_custom_call.1} parent=1 // pred_check_branch
      %56 = sbr.rel (0) target = $region21
    $region20: #{tpu_custom_call.1} parent=1 // pred_region
      _
    $region21: #{tpu_custom_call.1} parent=1 // pred_fallthru
      _
    // Predicated region
    $region22: #{tpu_custom_call.1} parent=1 // pred_check
      _
    $region23: #{tpu_custom_call.1} parent=1 // pred_check_branch
      %58 = sbr.rel (0) target = $region25
    $region24: #{tpu_custom_call.1} parent=1 // pred_region
      %60 = vsyncadd [#allocation9], 0
      %s61 = sshll.u32 %s5, 4
      %s62 = int_to_ptr.hbm [resolvable:$true] %s61
      %s63 = sshll.u32 [#allocation8], 4
      %s64 = int_to_ptr.vmem [resolvable:$true] %s63
      %69 = dma.hbm_to_vmem [thread:$0]  %s62, 512, %s64, [#allocation9], 64, 64, 4
    $region25: #{tpu_custom_call.1} parent=1 // pred_fallthru
      _
    // Predicated region
    $region26: #{tpu_custom_call.1} parent=1 // pred_check
      _
    $region27: #{tpu_custom_call.1} parent=1 // pred_check_branch
      %71 = sbr.rel (0) target = $region29
    $region28: #{tpu_custom_call.1} parent=1 // pred_region
      _
    $region29: #{tpu_custom_call.1} parent=1 // pred_fallthru
      _
    // Predicated region
    $region30: #{tpu_custom_call.1} parent=1 // pred_check
      _
    $region31: #{tpu_custom_call.1} parent=1 // pred_check_branch
      %73 = sbr.rel (0) target = $region33
    $region32: #{tpu_custom_call.1} parent=1 // pred_region
      %75 = dma.done [#allocation3], 128
    $region33: #{tpu_custom_call.1} parent=1 // pred_fallthru
      _
    // Predicated region
    $region34: #{tpu_custom_call.1} parent=1 // pred_check
      _
    $region35: #{tpu_custom_call.1} parent=1 // pred_check_branch
      %77 = sbr.rel (0) target = $region37
    $region36: #{tpu_custom_call.1} parent=1 // pred_region
      %79 = dma.done [#allocation6], 256
    $region37: #{tpu_custom_call.1} parent=1 // pred_fallthru
      _
    // Predicated region
    $region38: #{tpu_custom_call.1} parent=1 // pred_check
      _
    $region39: #{tpu_custom_call.1} parent=1 // pred_check_branch
      %81 = sbr.rel (0) target = $region41
    $region40: #{tpu_custom_call.1} parent=1 // pred_region
      %83 = dma.done [#allocation6], 512
    $region41: #{tpu_custom_call.1} parent=1 // pred_fallthru
      _
    // Predicated region
    $region42: #{tpu_custom_call.1} parent=1 // pred_check
      _
    $region43: #{tpu_custom_call.1} parent=1 // pred_check_branch
      %85 = sbr.rel (0) target = $region45
    $region44: #{tpu_custom_call.1} parent=1 // pred_region
      %87 = dma.done [#allocation9], 512
    $region45: #{tpu_custom_call.1} parent=1 // pred_fallthru
      _
    %v89 = vld [vmem:[#allocation2] sm:$0xff]
    %v90 = vpack.c.bf16 %v89, %v89
    %v91 = vld [vmem:[#allocation5] sm:$0xf]
    %v92 = vld [vmem:[#allocation5 + $0x4] sm:$0xf]
    %v93 = vld [vmem:[#allocation5 + $0x8] sm:$0xf]
    %v94 = vld [vmem:[#allocation5 + $0xc] sm:$0xf]
    %v95 = vld [vmem:[%s2] sm:$0x1]
    %v97 = vperm.slane %v95, 0
    %v103 = vunpack.c.l.b16 %v91
    %v104 = vunpack.c.l.b16 %v92
    %v105 = vunpack.c.l.b16 %v93
    %v106 = vunpack.c.l.b16 %v94
    %v107 = vpack.c.b16 %v104, %v103
    %v108 = vpack.c.b16 %v106, %v105
    %vm111 = vcmask 261120
    %v113 = vsel %vm111, %v90, 0
    %115 = vmatpush.bf16.msra.mxu0 0
    %116 = vmatpush.bf16.msra.mxu0 0
    %117 = vmatpush.bf16.msra.mxu0 0
    %118 = vmatpush.bf16.msra.mxu0 0
    %119 = vmatpush.bf16.msra.mxu0 0
    %120 = vmatpush.bf16.msra.mxu0 0
    %121 = vmatpush.bf16.msra.mxu0 %v108
    %122 = vmatpush.bf16.msra.mxu0 %v107
    %123 = vmatmul.bf16.gmra.mxu0 %v113
    %v124 = vpop.f32.mrf.mxu0
    %v125 = vadd.f32 %v97, %v124
    %v126 = vpop.f32.mrf.mxu0
    %127 = vdwg.mxu0
    %v128 = vtanh.pop %v125
    %v129 = vpack.c.bf16 %v128, %v128
    %v130 = vld [vmem:[#allocation7] sm:$0xf]
    %v131 = vld [vmem:[#allocation7 + $0x4] sm:$0xf]
    %v132 = vld [vmem:[#allocation7 + $0x8] sm:$0xf]
    %v133 = vld [vmem:[#allocation7 + $0xc] sm:$0xf]
    %v134 = vld [vmem:[#allocation7 + $0x10] sm:$0xf]
    %v135 = vld [vmem:[#allocation7 + $0x14] sm:$0xf]
    %v136 = vld [vmem:[#allocation7 + $0x18] sm:$0xf]
    %v137 = vld [vmem:[#allocation7 + $0x1c] sm:$0xf]
    %v138 = vld [vmem:[%s4] sm:$0x1]
    %v140 = vperm.slane %v138, 0
    %v150 = vunpack.c.l.b16 %v130
    %v151 = vunpack.c.l.b16 %v131
    %v152 = vunpack.c.l.b16 %v132
    %v153 = vunpack.c.l.b16 %v133
    %v154 = vunpack.c.l.b16 %v134
    %v155 = vunpack.c.l.b16 %v135
    %v156 = vunpack.c.l.b16 %v136
    %v157 = vunpack.c.l.b16 %v137
    %v158 = vpack.c.b16 %v151, %v150
    %v159 = vpack.c.b16 %v153, %v152
    %v160 = vpack.c.b16 %v155, %v154
    %v161 = vpack.c.b16 %v157, %v156
    %vm166 = vcmask 523264
    %v168 = vsel %vm166, %v129, 0
    %170 = vmatpush.bf16.msra.mxu0 0
    %171 = vmatpush.bf16.msra.mxu0 0
    %172 = vmatpush.bf16.msra.mxu0 0
    %173 = vmatpush.bf16.msra.mxu0 0
    %174 = vmatpush.bf16.msra.mxu0 %v161
    %175 = vmatpush.bf16.msra.mxu0 %v160
    %176 = vmatpush.bf16.msra.mxu0 %v159
    %177 = vmatpush.bf16.msra.mxu0 %v158
    %178 = vmatmul.bf16.gmra.mxu0 %v168
    %v179 = vpop.f32.mrf.mxu0
    %v180 = vadd.f32 %v140, %v179
    %v181 = vpop.f32.mrf.mxu0
    %182 = vdwg.mxu0
    %v183 = vtanh.pop %v180
    %v184 = vpack.c.bf16 %v183, %v183
    %v185 = vld [vmem:[#allocation8] sm:$0xf]
    %v186 = vld [vmem:[#allocation8 + $0x4] sm:$0xf]
    %v187 = vld [vmem:[#allocation8 + $0x8] sm:$0xf]
    %v188 = vld [vmem:[#allocation8 + $0xc] sm:$0xf]
    %v189 = vld [vmem:[#allocation8 + $0x10] sm:$0xf]
    %v190 = vld [vmem:[#allocation8 + $0x14] sm:$0xf]
    %v191 = vld [vmem:[#allocation8 + $0x18] sm:$0xf]
    %v192 = vld [vmem:[#allocation8 + $0x1c] sm:$0xf]
    %v193 = vld [vmem:[%s6] sm:$0x1]
    %v195 = vperm.slane %v193, 0
    %v205 = vunpack.c.l.b16 %v185
    %v206 = vunpack.c.l.b16 %v186
    %v207 = vunpack.c.l.b16 %v187
    %v208 = vunpack.c.l.b16 %v188
    %v209 = vunpack.c.l.b16 %v189
    %v210 = vunpack.c.l.b16 %v190
    %v211 = vunpack.c.l.b16 %v191
    %v212 = vunpack.c.l.b16 %v192
    %v213 = vpack.c.b16 %v206, %v205
    %v214 = vpack.c.b16 %v208, %v207
    %v215 = vpack.c.b16 %v210, %v209
    %v216 = vpack.c.b16 %v212, %v211
    %v222 = vsel %vm166, %v184, 0
    %224 = vmatpush.bf16.msra.mxu0 0
    %225 = vmatpush.bf16.msra.mxu0 0
    %226 = vmatpush.bf16.msra.mxu0 0
    %227 = vmatpush.bf16.msra.mxu0 0
    %228 = vmatpush.bf16.msra.mxu0 %v216
    %229 = vmatpush.bf16.msra.mxu0 %v215
    %230 = vmatpush.bf16.msra.mxu0 %v214
    %231 = vmatpush.bf16.msra.mxu0 %v213
    %232 = vmatmul.bf16.gmra.mxu0 %v222
    %v233 = vpop.f32.mrf.mxu0
    %v234 = vadd.f32 %v195, %v233
    %v235 = vpop.f32.mrf.mxu0
    %236 = vdwg.mxu0
    %237 = vst [vmem:[#allocation10] sm:$0xff] %v234
    // Predicated region
    $region46: #{tpu_custom_call.1} parent=1 // pred_check
      _
    $region47: #{tpu_custom_call.1} parent=1 // pred_check_branch
      %239 = sbr.rel (0) target = $region49
    $region48: #{tpu_custom_call.1} parent=1 // pred_region
      %241 = vsyncadd [#allocation4], 0
      %s243 = sshll.u32 [#allocation10], 4
      %s244 = int_to_ptr.vmem [resolvable:$true] %s243
      %s245 = sshll.u32 %s7, 4
      %s246 = int_to_ptr.hbm [resolvable:$true] %s245
      %248 = dma.vmem_to_hbm [thread:$0]  %s244, 128, %s246, [#allocation4]
    $region49: #{tpu_custom_call.1} parent=1 // pred_fallthru
      _
    // Predicated region
    $region50: #{tpu_custom_call.1} parent=1 // pred_check
      _
    $region51: #{tpu_custom_call.1} parent=1 // pred_check_branch
      %250 = sbr.rel (0) target = $region53
    $region52: #{tpu_custom_call.1} parent=1 // pred_region
      %252 = dma.done [#allocation4], 128
    $region53: #{tpu_custom_call.1} parent=1 // pred_fallthru
      _
    %253 = vsyncpa [#allocation3], 1
    %254 = vsyncpa [#allocation6], 1
    %255 = vsyncpa [#allocation9], 1
    %256 = vsyncpa [#allocation4], 1

</llo_original>
